<compile_context>
chip_gen: v5e
topology: v5e:2x2
jax: 0.10.0
libtpu: 0.0.40
codegen_flags: <defaults>
</compile_context>

<pallas_src>
import functools

import jax
import jax.numpy as jnp
import numpy as np
from jax import lax
from jax.experimental import pallas as pl
from jax.experimental.pallas import tpu as pltpu


def _round_up(v, m):
    return ((v + m - 1) // m) * m


def _cdiv(a, b):
    return (a + b - 1) // b


def _topk_mean_replace_kernel(x_ref, o_ref, *, k, chunk_rows, n_valid, keyed):
    """One (row_block, n_blk) tile. Rows are independent; they are processed in
    chunks of `chunk_rows` rows to keep the loop-carried live set small while
    giving the scheduler several independent cross-lane reduction chains."""
    row_block, n_blk = x_ref.shape
    num_chunks = row_block // chunk_rows

    col = lax.broadcasted_iota(jnp.int32, (chunk_rows, n_blk), 1)
    inv_k = jnp.float32(1.0 / k)          # static k -> constant multiply
    neg_inf = jnp.float32(-jnp.inf)

    def process_chunk(r0):
        if keyed:
            # bf16 fast path: ONE cross-lane reduction per extracted element.
            # Pack an order-preserving 16-bit value key and the reversed lane
            # index into one int32; a plain row max then yields the max value
            # AND its lowest index exactly (keys are unique per row).
            xf = x_ref[pl.ds(r0, chunk_rows), :].astype(jnp.float32)  # exact
            bits = pltpu.bitcast(xf, jnp.int32)
            skey = jnp.where(bits >= 0, bits, bits ^ jnp.int32(0x7FFFFFFF))
            keys = (skey >> 16) * jnp.int32(32768) + (jnp.int32(n_blk - 1) - col)
            if n_valid < n_blk:
                # OOB lanes of a boundary block: never the max.
                keys = jnp.where(col < n_valid, keys, jnp.int32(-(2 ** 31)))
            picked_key = jnp.int32(-(2 ** 31) + 1)
            for _ in range(k):                     # static k: fully unrolled
                kmax = jnp.max(keys, axis=-1, keepdims=True)
                keys = jnp.where(keys == kmax, picked_key, keys)
            picked = keys == picked_key
            # Re-load values only now (keeps the k-loop live set to `keys`).
            xe = x_ref[pl.ds(r0, chunk_rows), :].astype(jnp.float32)
            total = jnp.sum(jnp.where(picked, xe, 0.0), axis=-1, keepdims=True)
            out = jnp.where(picked, total * inv_k, jnp.float32(0.0))
        else:
            # Generic (f32) path: two cross-lane reductions per element
            # (row max, then lowest index among ties) -- matches torch.topk
            # lowest-index tie-break. No `sel` buffer: picked lanes are the
            # ones that were set to -inf.
            x_work = x_ref[pl.ds(r0, chunk_rows), :].astype(jnp.float32)
            if n_valid < n_blk:
                x_work = jnp.where(col < n_valid, x_work, neg_inf)
            acc = jnp.zeros((chunk_rows, 1), jnp.float32)
            for _ in range(k):                     # static k: fully unrolled
                cur_max = jnp.max(x_work, axis=-1, keepdims=True)
                idx_cand = jnp.where(x_work == cur_max, col, jnp.int32(n_blk))
                first = jnp.min(idx_cand, axis=-1, keepdims=True)
                acc = acc + cur_max
                x_work = jnp.where(col == first, neg_inf, x_work)
            # TODO(synk): rows legitimately containing -inf are treated as
            # already picked, and NaN rows diverge from torch.topk (jnp.max
            # propagates NaN) -- same caveats as most top-k kernels.
            picked = x_work == neg_inf
            out = jnp.where(picked, acc * inv_k, jnp.float32(0.0))
        o_ref[pl.ds(r0, chunk_rows), :] = out.astype(o_ref.dtype)

    if num_chunks == 1:
        process_chunk(0)
    else:
        def body(ci, carry):
            process_chunk(pl.multiple_of(ci * chunk_rows, chunk_rows))
            return carry
        # Chunks are independent: unrolling lets the scheduler overlap one
        # chunk's VPU selects with another chunk's XLU reduce.
        lax.fori_loop(0, num_chunks, body, 0,
                      unroll=True if num_chunks <= 8 else 2)


def _choose_tiling(rows, n_blk, row_align):
    """Pick (chunk_rows, row_block) for a (rows, n_blk-wide-blocks) problem."""
    # chunk_rows: widest chunk such that ~3 live (chunk_rows, n_blk) 32-bit
    # arrays stay under ~40 vregs (hides XLU/TRF latency, fewer loop iters).
    chunk_rows = row_align
    max_inbounds = max(row_align, (rows // row_align) * row_align)
    for cand in (2 * row_align, 4 * row_align, 8 * row_align):
        if cand * n_blk * 4 * 3 <= 160 * 1024 and cand <= max_inbounds:
            chunk_rows = cand
    # row_block: as many chunks as useful under a ~2 MiB-per-buffer cap, so
    # double-buffered in+out tiles stay well below v5e's 16 MiB scoped-VMEM
    # default and v7x's 32 MiB scoped (64 MiB physical).
    bytes_per_row = n_blk * 4
    vmem_rows = max(chunk_rows,
                    ((2 * 1024 * 1024) // bytes_per_row) // chunk_rows * chunk_rows)
    row_block = min(_round_up(256, chunk_rows), vmem_rows,
                    _round_up(rows, chunk_rows))
    if rows >= chunk_rows:
        # Keep every block except the last fully in bounds (standard remainder).
        row_block = max(chunk_rows,
                        min(row_block, (rows // chunk_rows) * chunk_rows))
    # v7x has 2 TensorCores: give the "parallel" grid axis >= 2 steps whenever
    # the row count allows it.
    if _cdiv(rows, row_block) == 1 and rows >= 2 * chunk_rows:
        row_block = _round_up(_cdiv(rows, 2), chunk_rows)
    return chunk_rows, row_block


def topk_mask_hw_mean_replace(x, topk_keep_num):
    """JAX/Pallas equivalent of TopKMaskHWMeanReplace.forward(x, tau).

    Returns (out, None), exactly like the PyTorch module."""
    b, c, h, w = x.shape
    n = h * w
    k = max(int(topk_keep_num), 1)
    k = min(k, n)                      # torch.topk would error for k > H*W

    rows = b * c
    n_blk = _round_up(n, 128)          # lane-dense block width
    # bf16 takes the packed value+index single-reduce path (index must fit in
    # 15 bits); everything else uses the generic f32 path.
    keyed = (x.dtype == jnp.bfloat16) and (n_blk <= 32768)
    row_align = 16 if keyed else 8     # bf16 packs 2 rows per sublane
    chunk_rows, row_block = _choose_tiling(rows, n_blk, row_align)

    # No wrapper-side padding or slicing: boundary-block OOB lanes are masked
    # in-kernel and OOB rows are dropped on store by Pallas.
    x_flat = x.reshape(rows, n)
    grid = (_cdiv(rows, row_block),)

    # Only raise the scoped-VMEM limit when a huge H*W actually needs it.
    tile_bytes = row_block * n_blk * 4
    need = 4 * tile_bytes + (2 << 20)
    compiler_params = pltpu.CompilerParams(
        dimension_semantics=("parallel",),
        vmem_limit_bytes=need if need > (12 << 20) else None,
    )

    out_flat = pl.pallas_call(
        functools.partial(_topk_mean_replace_kernel, k=k,
                          chunk_rows=chunk_rows, n_valid=n, keyed=keyed),
        out_shape=jax.ShapeDtypeStruct((rows, n), x.dtype),
        grid=grid,
        in_specs=[pl.BlockSpec((row_block, n_blk), lambda i: (i, 0))],
        out_specs=pl.BlockSpec((row_block, n_blk), lambda i: (i, 0)),
        compiler_params=compiler_params,
    )(x_flat)

    return out_flat.reshape(b, c, h, w), None


def _reference(x, k):
    """Pure-JAX reference mirroring torch.topk + scatter (mean in f32)."""
    b, c, h, w = x.shape
    n = h * w
    xr = x.reshape(b, c, n).astype(jnp.float32)
    vals, idx = lax.top_k(xr, k)
    mean = vals.mean(axis=-1, keepdims=True)
    mask = jax.nn.one_hot(idx, n, dtype=jnp.float32).sum(axis=2) > 0
    out = jnp.where(mask, mean, 0.0).astype(x.dtype)
    return out.reshape(b, c, h, w)


if __name__ == "__main__":
    key = jax.random.PRNGKey(0)

    # Primary shape consistent with the module: B=2, C=4, 16x16 spatial, top-8.
    B, C, H, W = 2, 4, 16, 16
    TOPK = 8
    x = jax.random.normal(key, (B, C, H, W), dtype=jnp.float32)
    out, aux = topk_mask_hw_mean_replace(x, TOPK)
    out = jax.block_until_ready(out)
    assert aux is None
    assert out.shape == (B, C, H, W) and out.dtype == x.dtype
    np.testing.assert_allclose(np.asarray(out),
                               np.asarray(_reference(x, TOPK)),
                               rtol=1e-5, atol=1e-5)

    # bf16 input exercises the packed-key single-reduce path.
    xb = jax.random.normal(jax.random.PRNGKey(1), (2, 8, 16, 16),
                           dtype=jnp.bfloat16)
    outb, _ = topk_mask_hw_mean_replace(xb, TOPK)
    outb = jax.block_until_ready(outb)
    np.testing.assert_allclose(np.asarray(outb).astype(np.float32),
                               np.asarray(_reference(xb, TOPK)).astype(np.float32),
                               rtol=2e-2, atol=2e-2)

    # Unaligned H*W and row count exercise in-kernel OOB-lane masking and
    # remainder row blocks (no wrapper pads / slices anywhere).
    xu = jax.random.normal(jax.random.PRNGKey(2), (3, 4, 10, 10),
                           dtype=jnp.float32)
    outu, _ = topk_mask_hw_mean_replace(xu, 5)
    outu = jax.block_until_ready(outu)
    np.testing.assert_allclose(np.asarray(outu),
                               np.asarray(_reference(xu, 5)),
                               rtol=1e-5, atol=1e-5)

    print("KERNEL_OK")
</pallas_src>

<mosaic_0001>
module attributes {stable_mosaic.version = 11 : i64} {
  func.func @_topk_mean_replace_kernel(%arg0: i32, %arg1: memref<8x256xf32, #tpu.memory_space<vmem>>, %arg2: memref<8x256xf32, #tpu.memory_space<vmem>>) attributes {dimension_semantics = [#tpu.dimension_semantics<parallel>], iteration_bounds = array<i64: 1>, scalar_prefetch = 0 : i64, scratch_operands = 0 : i64, tpu.core_type = #tpu.core_type<tc>, window_params = [{transform_indices = @transform_0, window_bounds = array<i64: 8, 256>}, {transform_indices = @transform_1, window_bounds = array<i64: 8, 256>}]} {
    %0 = tpu.iota {dimensions = array<i32: 1>} : vector<8x256xi32>
    %c0 = arith.constant 0 : index
    %c0_0 = arith.constant 0 : index
    %1 = vector.load %arg1[%c0, %c0_0] : memref<8x256xf32, #tpu.memory_space<vmem>>, vector<8x256xf32>
    %cst = arith.constant 0.000000e+00 : f32
    %2 = vector.broadcast %cst : f32 to vector<8x1xf32>
    %cst_1 = arith.constant dense<0xFF800000> : vector<8xf32>
    %3 = vector.multi_reduction <maximumf>, %1, %cst_1 [1] : vector<8x256xf32> to vector<8xf32>
    %4 = vector.shape_cast %3 : vector<8xf32> to vector<8x1xf32>
    %5 = vector.broadcast %4 : vector<8x1xf32> to vector<8x256xf32>
    %6 = arith.cmpf oeq, %1, %5 : vector<8x256xf32>
    %c256_i32 = arith.constant 256 : i32
    %7 = vector.broadcast %c256_i32 : i32 to vector<8x256xi32>
    %8 = arith.select %6, %0, %7 : vector<8x256xi1>, vector<8x256xi32>
    %cst_2 = arith.constant dense<2147483647> : vector<8xi32>
    %9 = vector.multi_reduction <minsi>, %8, %cst_2 [1] : vector<8x256xi32> to vector<8xi32>
    %10 = vector.shape_cast %9 : vector<8xi32> to vector<8x1xi32>
    %11 = arith.addf %2, %4 : vector<8x1xf32>
    %12 = vector.broadcast %10 : vector<8x1xi32> to vector<8x256xi32>
    %13 = arith.cmpi eq, %0, %12 : vector<8x256xi32>
    %cst_3 = arith.constant 0xFF800000 : f32
    %14 = vector.broadcast %cst_3 : f32 to vector<8x256xf32>
    %15 = arith.select %13, %14, %1 : vector<8x256xi1>, vector<8x256xf32>
    %cst_4 = arith.constant dense<0xFF800000> : vector<8xf32>
    %16 = vector.multi_reduction <maximumf>, %15, %cst_4 [1] : vector<8x256xf32> to vector<8xf32>
    %17 = vector.shape_cast %16 : vector<8xf32> to vector<8x1xf32>
    %18 = vector.broadcast %17 : vector<8x1xf32> to vector<8x256xf32>
    %19 = arith.cmpf oeq, %15, %18 : vector<8x256xf32>
    %c256_i32_5 = arith.constant 256 : i32
    %20 = vector.broadcast %c256_i32_5 : i32 to vector<8x256xi32>
    %21 = arith.select %19, %0, %20 : vector<8x256xi1>, vector<8x256xi32>
    %cst_6 = arith.constant dense<2147483647> : vector<8xi32>
    %22 = vector.multi_reduction <minsi>, %21, %cst_6 [1] : vector<8x256xi32> to vector<8xi32>
    %23 = vector.shape_cast %22 : vector<8xi32> to vector<8x1xi32>
    %24 = arith.addf %11, %17 : vector<8x1xf32>
    %25 = vector.broadcast %23 : vector<8x1xi32> to vector<8x256xi32>
    %26 = arith.cmpi eq, %0, %25 : vector<8x256xi32>
    %cst_7 = arith.constant 0xFF800000 : f32
    %27 = vector.broadcast %cst_7 : f32 to vector<8x256xf32>
    %28 = arith.select %26, %27, %15 : vector<8x256xi1>, vector<8x256xf32>
    %cst_8 = arith.constant dense<0xFF800000> : vector<8xf32>
    %29 = vector.multi_reduction <maximumf>, %28, %cst_8 [1] : vector<8x256xf32> to vector<8xf32>
    %30 = vector.shape_cast %29 : vector<8xf32> to vector<8x1xf32>
    %31 = vector.broadcast %30 : vector<8x1xf32> to vector<8x256xf32>
    %32 = arith.cmpf oeq, %28, %31 : vector<8x256xf32>
    %c256_i32_9 = arith.constant 256 : i32
    %33 = vector.broadcast %c256_i32_9 : i32 to vector<8x256xi32>
    %34 = arith.select %32, %0, %33 : vector<8x256xi1>, vector<8x256xi32>
    %cst_10 = arith.constant dense<2147483647> : vector<8xi32>
    %35 = vector.multi_reduction <minsi>, %34, %cst_10 [1] : vector<8x256xi32> to vector<8xi32>
    %36 = vector.shape_cast %35 : vector<8xi32> to vector<8x1xi32>
    %37 = arith.addf %24, %30 : vector<8x1xf32>
    %38 = vector.broadcast %36 : vector<8x1xi32> to vector<8x256xi32>
    %39 = arith.cmpi eq, %0, %38 : vector<8x256xi32>
    %cst_11 = arith.constant 0xFF800000 : f32
    %40 = vector.broadcast %cst_11 : f32 to vector<8x256xf32>
    %41 = arith.select %39, %40, %28 : vector<8x256xi1>, vector<8x256xf32>
    %cst_12 = arith.constant dense<0xFF800000> : vector<8xf32>
    %42 = vector.multi_reduction <maximumf>, %41, %cst_12 [1] : vector<8x256xf32> to vector<8xf32>
    %43 = vector.shape_cast %42 : vector<8xf32> to vector<8x1xf32>
    %44 = vector.broadcast %43 : vector<8x1xf32> to vector<8x256xf32>
    %45 = arith.cmpf oeq, %41, %44 : vector<8x256xf32>
    %c256_i32_13 = arith.constant 256 : i32
    %46 = vector.broadcast %c256_i32_13 : i32 to vector<8x256xi32>
    %47 = arith.select %45, %0, %46 : vector<8x256xi1>, vector<8x256xi32>
    %cst_14 = arith.constant dense<2147483647> : vector<8xi32>
    %48 = vector.multi_reduction <minsi>, %47, %cst_14 [1] : vector<8x256xi32> to vector<8xi32>
    %49 = vector.shape_cast %48 : vector<8xi32> to vector<8x1xi32>
    %50 = arith.addf %37, %43 : vector<8x1xf32>
    %51 = vector.broadcast %49 : vector<8x1xi32> to vector<8x256xi32>
    %52 = arith.cmpi eq, %0, %51 : vector<8x256xi32>
    %cst_15 = arith.constant 0xFF800000 : f32
    %53 = vector.broadcast %cst_15 : f32 to vector<8x256xf32>
    %54 = arith.select %52, %53, %41 : vector<8x256xi1>, vector<8x256xf32>
    %cst_16 = arith.constant dense<0xFF800000> : vector<8xf32>
    %55 = vector.multi_reduction <maximumf>, %54, %cst_16 [1] : vector<8x256xf32> to vector<8xf32>
    %56 = vector.shape_cast %55 : vector<8xf32> to vector<8x1xf32>
    %57 = vector.broadcast %56 : vector<8x1xf32> to vector<8x256xf32>
    %58 = arith.cmpf oeq, %54, %57 : vector<8x256xf32>
    %c256_i32_17 = arith.constant 256 : i32
    %59 = vector.broadcast %c256_i32_17 : i32 to vector<8x256xi32>
    %60 = arith.select %58, %0, %59 : vector<8x256xi1>, vector<8x256xi32>
    %cst_18 = arith.constant dense<2147483647> : vector<8xi32>
    %61 = vector.multi_reduction <minsi>, %60, %cst_18 [1] : vector<8x256xi32> to vector<8xi32>
    %62 = vector.shape_cast %61 : vector<8xi32> to vector<8x1xi32>
    %63 = arith.addf %50, %56 : vector<8x1xf32>
    %64 = vector.broadcast %62 : vector<8x1xi32> to vector<8x256xi32>
    %65 = arith.cmpi eq, %0, %64 : vector<8x256xi32>
    %cst_19 = arith.constant 0xFF800000 : f32
    %66 = vector.broadcast %cst_19 : f32 to vector<8x256xf32>
    %67 = arith.select %65, %66, %54 : vector<8x256xi1>, vector<8x256xf32>
    %cst_20 = arith.constant dense<0xFF800000> : vector<8xf32>
    %68 = vector.multi_reduction <maximumf>, %67, %cst_20 [1] : vector<8x256xf32> to vector<8xf32>
    %69 = vector.shape_cast %68 : vector<8xf32> to vector<8x1xf32>
    %70 = vector.broadcast %69 : vector<8x1xf32> to vector<8x256xf32>
    %71 = arith.cmpf oeq, %67, %70 : vector<8x256xf32>
    %c256_i32_21 = arith.constant 256 : i32
    %72 = vector.broadcast %c256_i32_21 : i32 to vector<8x256xi32>
    %73 = arith.select %71, %0, %72 : vector<8x256xi1>, vector<8x256xi32>
    %cst_22 = arith.constant dense<2147483647> : vector<8xi32>
    %74 = vector.multi_reduction <minsi>, %73, %cst_22 [1] : vector<8x256xi32> to vector<8xi32>
    %75 = vector.shape_cast %74 : vector<8xi32> to vector<8x1xi32>
    %76 = arith.addf %63, %69 : vector<8x1xf32>
    %77 = vector.broadcast %75 : vector<8x1xi32> to vector<8x256xi32>
    %78 = arith.cmpi eq, %0, %77 : vector<8x256xi32>
    %cst_23 = arith.constant 0xFF800000 : f32
    %79 = vector.broadcast %cst_23 : f32 to vector<8x256xf32>
    %80 = arith.select %78, %79, %67 : vector<8x256xi1>, vector<8x256xf32>
    %cst_24 = arith.constant dense<0xFF800000> : vector<8xf32>
    %81 = vector.multi_reduction <maximumf>, %80, %cst_24 [1] : vector<8x256xf32> to vector<8xf32>
    %82 = vector.shape_cast %81 : vector<8xf32> to vector<8x1xf32>
    %83 = vector.broadcast %82 : vector<8x1xf32> to vector<8x256xf32>
    %84 = arith.cmpf oeq, %80, %83 : vector<8x256xf32>
    %c256_i32_25 = arith.constant 256 : i32
    %85 = vector.broadcast %c256_i32_25 : i32 to vector<8x256xi32>
    %86 = arith.select %84, %0, %85 : vector<8x256xi1>, vector<8x256xi32>
    %cst_26 = arith.constant dense<2147483647> : vector<8xi32>
    %87 = vector.multi_reduction <minsi>, %86, %cst_26 [1] : vector<8x256xi32> to vector<8xi32>
    %88 = vector.shape_cast %87 : vector<8xi32> to vector<8x1xi32>
    %89 = arith.addf %76, %82 : vector<8x1xf32>
    %90 = vector.broadcast %88 : vector<8x1xi32> to vector<8x256xi32>
    %91 = arith.cmpi eq, %0, %90 : vector<8x256xi32>
    %cst_27 = arith.constant 0xFF800000 : f32
    %92 = vector.broadcast %cst_27 : f32 to vector<8x256xf32>
    %93 = arith.select %91, %92, %80 : vector<8x256xi1>, vector<8x256xf32>
    %cst_28 = arith.constant dense<0xFF800000> : vector<8xf32>
    %94 = vector.multi_reduction <maximumf>, %93, %cst_28 [1] : vector<8x256xf32> to vector<8xf32>
    %95 = vector.shape_cast %94 : vector<8xf32> to vector<8x1xf32>
    %96 = vector.broadcast %95 : vector<8x1xf32> to vector<8x256xf32>
    %97 = arith.cmpf oeq, %93, %96 : vector<8x256xf32>
    %c256_i32_29 = arith.constant 256 : i32
    %98 = vector.broadcast %c256_i32_29 : i32 to vector<8x256xi32>
    %99 = arith.select %97, %0, %98 : vector<8x256xi1>, vector<8x256xi32>
    %cst_30 = arith.constant dense<2147483647> : vector<8xi32>
    %100 = vector.multi_reduction <minsi>, %99, %cst_30 [1] : vector<8x256xi32> to vector<8xi32>
    %101 = vector.shape_cast %100 : vector<8xi32> to vector<8x1xi32>
    %102 = arith.addf %89, %95 : vector<8x1xf32>
    %103 = vector.broadcast %101 : vector<8x1xi32> to vector<8x256xi32>
    %104 = arith.cmpi eq, %0, %103 : vector<8x256xi32>
    %cst_31 = arith.constant 0xFF800000 : f32
    %105 = vector.broadcast %cst_31 : f32 to vector<8x256xf32>
    %106 = arith.select %104, %105, %93 : vector<8x256xi1>, vector<8x256xf32>
    %cst_32 = arith.constant 0xFF800000 : f32
    %107 = vector.broadcast %cst_32 : f32 to vector<8x256xf32>
    %108 = arith.cmpf oeq, %106, %107 : vector<8x256xf32>
    %cst_33 = arith.constant 1.250000e-01 : f32
    %109 = vector.broadcast %cst_33 : f32 to vector<8x1xf32>
    %110 = arith.mulf %102, %109 : vector<8x1xf32>
    %cst_34 = arith.constant 0.000000e+00 : f32
    %111 = vector.shape_cast %110 : vector<8x1xf32> to vector<8x1xf32>
    %112 = vector.broadcast %111 : vector<8x1xf32> to vector<8x256xf32>
    %113 = vector.broadcast %cst_34 : f32 to vector<8x256xf32>
    %114 = arith.select %108, %112, %113 : vector<8x256xi1>, vector<8x256xf32>
    %c0_35 = arith.constant 0 : index
    %c0_36 = arith.constant 0 : index
    %115 = vector.load %arg2[%c0_35, %c0_36] : memref<8x256xf32, #tpu.memory_space<vmem>>, vector<8x256xf32>
    tpu.vector_store %arg2[%c0_35, %c0_36], %114 {strides = array<i32>} : memref<8x256xf32, #tpu.memory_space<vmem>>, vector<8x256xf32>,
    return
  }
  func.func @transform_0(%arg0: i32) -> (i32, i32) {
    %c0_i32 = arith.constant 0 : i32
    %c0_i32_0 = arith.constant 0 : i32
    return %arg0, %c0_i32 : i32, i32
  }
  func.func @transform_1(%arg0: i32) -> (i32, i32) {
    %c0_i32 = arith.constant 0 : i32
    %c0_i32_0 = arith.constant 0 : i32
    return %arg0, %c0_i32 : i32, i32
  }
}

</mosaic_0001>

<llo_original>
// kernel: tpu_custom_call.1
$region0: #{tpu_custom_call.1}
  #allocation0 [shape = 'u32[]', space=smem, size = 0x4, offset = 0x4, fixed_abs, tag = 'smem constant byte address 0x4 - core index']
  #allocation1 [shape = 'u32[72,128]{1,0:T(1,128)}', space=vmem, size = 0x9000, scoped, tag = 'internal scratch']
  %s0 = inlined_call_operand.hbm [shape: f32[8,256], index: 0, kind: input, shape index: {}]
  %s1 = inlined_call_operand.hbm [shape: f32[8,256], index: 1, kind: output, shape index: {}]
  %s2 = sld [smem:[#allocation0]]
  $region18: #{tpu_custom_call.1} parent=0
    _
  %s4 = ssub.s32 1, %s2
  %s5 = scalar_select 0, %s4, %s2
  $region1: #{tpu_custom_call.1} parent=0
    #allocation2 [shape = 'u8[8192]{0}', space=vmem, size = 0x2000, scoped, tag = 'input window, operand 0, single buffered']
    #allocation3 [shape = 's32[1]{0}', space=sflag, size = 0x4, scoped, tag = 'scoped memory for tpu_custom_call.1']
    #allocation4 [shape = 's32[1]{0}', space=sflag, size = 0x4, scoped, tag = 'scoped memory for tpu_custom_call.1']
    #allocation5 [shape = 'u8[8192]{0}', space=vmem, size = 0x2000, scoped, tag = 'output window, operand 0, single buffered']
    %6 = vsyncpa [#allocation3], 0
    %7 = vsyncpa [#allocation4], 0
    // Predicated region
    $region2: #{tpu_custom_call.1} parent=1 // pred_check
      _
    $region3: #{tpu_custom_call.1} parent=1 // pred_check_branch
      %9 = sbr.rel (0) target = $region5
    $region4: #{tpu_custom_call.1} parent=1 // pred_region
      %11 = vsyncadd [#allocation3], 0
      %s13 = sshll.u32 %s0, 4
      %s14 = int_to_ptr.hbm [resolvable:$true] %s13
      %s15 = sshll.u32 [#allocation2], 4
      %s16 = int_to_ptr.vmem [resolvable:$true] %s15
      %18 = dma.hbm_to_vmem [thread:$0]  %s14, 256, %s16, [#allocation3]
    $region5: #{tpu_custom_call.1} parent=1 // pred_fallthru
      _
    // Predicated region
    $region6: #{tpu_custom_call.1} parent=1 // pred_check
      _
    $region7: #{tpu_custom_call.1} parent=1 // pred_check_branch
      %20 = sbr.rel (0) target = $region9
    $region8: #{tpu_custom_call.1} parent=1 // pred_region
      %22 = dma.done [#allocation3], 256
    $region9: #{tpu_custom_call.1} parent=1 // pred_fallthru
      _
    %v23 = vlaneseq
    %v24 = vand.u32 %v23, 127
    %v25 = vadd.s32 %v24, 128
    %v26 = vld [vmem:[#allocation2] sm:$0xff]
    %v27 = vld [vmem:[#allocation2 + $0x8] sm:$0xff]
    %v28 = vmax.f32 %v26, %v27
    %29 = vmax.xlane.f32.xlu0 %v28
    %v30 = vpop.xlane.xlu0 %29
    %vm31 = vcmp.eq.f32.partialorder %v26, %v30
    %vm32 = vcmp.eq.f32.partialorder %v27, %v30
    %v33 = vsel %vm31, %v24, 256
    %v34 = vsel %vm32, %v25, 256
    %vm35 = vcmp.lt.s32.totalorder %v33, %v34
    %v36 = vsel %vm35, %v33, %v34
    %v37 = vand.u32 %v36, 65535
    %v38 = vshra.s32 %v36, 16
    %v39 = vcvt.s32.f32 %v37
    %v40 = vcvt.s32.f32 %v38
    %41 = vmin.xlane.f32.xlu0 %v40
    %v42 = vpop.xlane.xlu0 %41
    %vm43 = vcmp.eq.f32.partialorder %v40, %v42
    %v44 = vsel %vm43, %v39, inf
    %45 = vmin.xlane.f32.xlu0 %v44
    %v46 = vpop.xlane.xlu0 %45
    %v47 = vcvt.f32.s32 %v46
    %v48 = vcvt.f32.s32 %v42
    %v49 = vshll.u32 %v48, 16
    %v50 = vadd.s32 %v49, %v47
    %v51 = vadd.f32 %v30, 0.0
    %vm52 = vcmp.eq.s32.totalorder %v24, %v50
    %vm53 = vcmp.eq.s32.totalorder %v25, %v50
    %v54 = vsel %vm52, -inf, %v26
    %v55 = vsel %vm53, -inf, %v27
    %v56 = vmax.f32 %v54, %v55
    %57 = vmax.xlane.f32.xlu0 %v56
    %v58 = vpop.xlane.xlu0 %57
    %vm59 = vcmp.eq.f32.partialorder %v54, %v58
    %vm60 = vcmp.eq.f32.partialorder %v55, %v58
    %v61 = vsel %vm59, %v24, 256
    %v62 = vsel %vm60, %v25, 256
    %vm63 = vcmp.lt.s32.totalorder %v61, %v62
    %v64 = vsel %vm63, %v61, %v62
    %v65 = vand.u32 %v64, 65535
    %v66 = vshra.s32 %v64, 16
    %v67 = vcvt.s32.f32 %v65
    %v68 = vcvt.s32.f32 %v66
    %69 = vmin.xlane.f32.xlu0 %v68
    %v70 = vpop.xlane.xlu0 %69
    %vm71 = vcmp.eq.f32.partialorder %v68, %v70
    %v72 = vsel %vm71, %v67, inf
    %73 = vmin.xlane.f32.xlu0 %v72
    %v74 = vpop.xlane.xlu0 %73
    %v75 = vcvt.f32.s32 %v74
    %v76 = vcvt.f32.s32 %v70
    %v77 = vshll.u32 %v76, 16
    %v78 = vadd.s32 %v77, %v75
    %v79 = vadd.f32 %v51, %v58
    %vm80 = vcmp.eq.s32.totalorder %v24, %v78
    %vm81 = vcmp.eq.s32.totalorder %v25, %v78
    %v82 = vsel %vm80, -inf, %v54
    %v83 = vsel %vm81, -inf, %v55
    %v84 = vmax.f32 %v82, %v83
    %85 = vmax.xlane.f32.xlu0 %v84
    %v86 = vpop.xlane.xlu0 %85
    %vm87 = vcmp.eq.f32.partialorder %v82, %v86
    %vm88 = vcmp.eq.f32.partialorder %v83, %v86
    %v89 = vsel %vm87, %v24, 256
    %v90 = vsel %vm88, %v25, 256
    %vm91 = vcmp.lt.s32.totalorder %v89, %v90
    %v92 = vsel %vm91, %v89, %v90
    %v93 = vand.u32 %v92, 65535
    %v94 = vshra.s32 %v92, 16
    %v95 = vcvt.s32.f32 %v93
    %v96 = vcvt.s32.f32 %v94
    %97 = vmin.xlane.f32.xlu0 %v96
    %v98 = vpop.xlane.xlu0 %97
    %vm99 = vcmp.eq.f32.partialorder %v96, %v98
    %v100 = vsel %vm99, %v95, inf
    %101 = vmin.xlane.f32.xlu0 %v100
    %v102 = vpop.xlane.xlu0 %101
    %v103 = vcvt.f32.s32 %v102
    %v104 = vcvt.f32.s32 %v98
    %v105 = vshll.u32 %v104, 16
    %v106 = vadd.s32 %v105, %v103
    %v107 = vadd.f32 %v79, %v86
    %vm108 = vcmp.eq.s32.totalorder %v24, %v106
    %vm109 = vcmp.eq.s32.totalorder %v25, %v106
    %v110 = vsel %vm108, -inf, %v82
    %v111 = vsel %vm109, -inf, %v83
    %v112 = vmax.f32 %v110, %v111
    %113 = vmax.xlane.f32.xlu0 %v112
    %v114 = vpop.xlane.xlu0 %113
    %vm115 = vcmp.eq.f32.partialorder %v110, %v114
    %vm116 = vcmp.eq.f32.partialorder %v111, %v114
    %v117 = vsel %vm115, %v24, 256
    %v118 = vsel %vm116, %v25, 256
    %vm119 = vcmp.lt.s32.totalorder %v117, %v118
    %v120 = vsel %vm119, %v117, %v118
    %v121 = vand.u32 %v120, 65535
    %v122 = vshra.s32 %v120, 16
    %v123 = vcvt.s32.f32 %v121
    %v124 = vcvt.s32.f32 %v122
    %125 = vmin.xlane.f32.xlu0 %v124
    %v126 = vpop.xlane.xlu0 %125
    %vm127 = vcmp.eq.f32.partialorder %v124, %v126
    %v128 = vsel %vm127, %v123, inf
    %129 = vmin.xlane.f32.xlu0 %v128
    %v130 = vpop.xlane.xlu0 %129
    %v131 = vcvt.f32.s32 %v130
    %v132 = vcvt.f32.s32 %v126
    %v133 = vshll.u32 %v132, 16
    %v134 = vadd.s32 %v133, %v131
    %v135 = vadd.f32 %v107, %v114
    %vm136 = vcmp.eq.s32.totalorder %v24, %v134
    %vm137 = vcmp.eq.s32.totalorder %v25, %v134
    %v138 = vsel %vm136, -inf, %v110
    %v139 = vsel %vm137, -inf, %v111
    %v140 = vmax.f32 %v138, %v139
    %141 = vmax.xlane.f32.xlu0 %v140
    %v142 = vpop.xlane.xlu0 %141
    %vm143 = vcmp.eq.f32.partialorder %v138, %v142
    %vm144 = vcmp.eq.f32.partialorder %v139, %v142
    %v145 = vsel %vm143, %v24, 256
    %v146 = vsel %vm144, %v25, 256
    %vm147 = vcmp.lt.s32.totalorder %v145, %v146
    %v148 = vsel %vm147, %v145, %v146
    %v149 = vand.u32 %v148, 65535
    %v150 = vshra.s32 %v148, 16
    %v151 = vcvt.s32.f32 %v149
    %v152 = vcvt.s32.f32 %v150
    %153 = vmin.xlane.f32.xlu0 %v152
    %v154 = vpop.xlane.xlu0 %153
    %vm155 = vcmp.eq.f32.partialorder %v152, %v154
    %v156 = vsel %vm155, %v151, inf
    %157 = vmin.xlane.f32.xlu0 %v156
    %v158 = vpop.xlane.xlu0 %157
    %v159 = vcvt.f32.s32 %v158
    %v160 = vcvt.f32.s32 %v154
    %v161 = vshll.u32 %v160, 16
    %v162 = vadd.s32 %v161, %v159
    %v163 = vadd.f32 %v135, %v142
    %vm164 = vcmp.eq.s32.totalorder %v24, %v162
    %vm165 = vcmp.eq.s32.totalorder %v25, %v162
    %v166 = vsel %vm164, -inf, %v138
    %v167 = vsel %vm165, -inf, %v139
    %v168 = vmax.f32 %v166, %v167
    %169 = vmax.xlane.f32.xlu0 %v168
    %v170 = vpop.xlane.xlu0 %169
    %vm171 = vcmp.eq.f32.partialorder %v166, %v170
    %vm172 = vcmp.eq.f32.partialorder %v167, %v170
    %v173 = vsel %vm171, %v24, 256
    %v174 = vsel %vm172, %v25, 256
    %vm175 = vcmp.lt.s32.totalorder %v173, %v174
    %v176 = vsel %vm175, %v173, %v174
    %v177 = vand.u32 %v176, 65535
    %v178 = vshra.s32 %v176, 16
    %v179 = vcvt.s32.f32 %v177
    %v180 = vcvt.s32.f32 %v178
    %181 = vmin.xlane.f32.xlu0 %v180
    %v182 = vpop.xlane.xlu0 %181
    %vm183 = vcmp.eq.f32.partialorder %v180, %v182
    %v184 = vsel %vm183, %v179, inf
    %185 = vmin.xlane.f32.xlu0 %v184
    %v186 = vpop.xlane.xlu0 %185
    %v187 = vcvt.f32.s32 %v186
    %v188 = vcvt.f32.s32 %v182
    %v189 = vshll.u32 %v188, 16
    %v190 = vadd.s32 %v189, %v187
    %v191 = vadd.f32 %v163, %v170
    %vm192 = vcmp.eq.s32.totalorder %v24, %v190
    %vm193 = vcmp.eq.s32.totalorder %v25, %v190
    %v194 = vsel %vm192, -inf, %v166
    %v195 = vsel %vm193, -inf, %v167
    %v196 = vmax.f32 %v194, %v195
    %197 = vmax.xlane.f32.xlu0 %v196
    %v198 = vpop.xlane.xlu0 %197
    %vm199 = vcmp.eq.f32.partialorder %v194, %v198
    %vm200 = vcmp.eq.f32.partialorder %v195, %v198
    %v201 = vsel %vm199, %v24, 256
    %v202 = vsel %vm200, %v25, 256
    %vm203 = vcmp.lt.s32.totalorder %v201, %v202
    %v204 = vsel %vm203, %v201, %v202
    %v205 = vand.u32 %v204, 65535
    %v206 = vshra.s32 %v204, 16
    %v207 = vcvt.s32.f32 %v205
    %v208 = vcvt.s32.f32 %v206
    %209 = vmin.xlane.f32.xlu0 %v208
    %v210 = vpop.xlane.xlu0 %209
    %vm211 = vcmp.eq.f32.partialorder %v208, %v210
    %v212 = vsel %vm211, %v207, inf
    %213 = vmin.xlane.f32.xlu0 %v212
    %v214 = vpop.xlane.xlu0 %213
    %v215 = vcvt.f32.s32 %v214
    %v216 = vcvt.f32.s32 %v210
    %v217 = vshll.u32 %v216, 16
    %v218 = vadd.s32 %v217, %v215
    %v219 = vadd.f32 %v191, %v198
    %vm220 = vcmp.eq.s32.totalorder %v24, %v218
    %vm221 = vcmp.eq.s32.totalorder %v25, %v218
    %v222 = vsel %vm220, -inf, %v194
    %v223 = vsel %vm221, -inf, %v195
    %v224 = vmax.f32 %v222, %v223
    %225 = vmax.xlane.f32.xlu0 %v224
    %v226 = vpop.xlane.xlu0 %225
    %vm227 = vcmp.eq.f32.partialorder %v222, %v226
    %vm228 = vcmp.eq.f32.partialorder %v223, %v226
    %v229 = vsel %vm227, %v24, 256
    %v230 = vsel %vm228, %v25, 256
    %vm231 = vcmp.lt.s32.totalorder %v229, %v230
    %v232 = vsel %vm231, %v229, %v230
    %v233 = vand.u32 %v232, 65535
    %v234 = vshra.s32 %v232, 16
    %v235 = vcvt.s32.f32 %v233
    %v236 = vcvt.s32.f32 %v234
    %237 = vmin.xlane.f32.xlu0 %v236
    %v238 = vpop.xlane.xlu0 %237
    %vm239 = vcmp.eq.f32.partialorder %v236, %v238
    %v240 = vsel %vm239, %v235, inf
    %241 = vmin.xlane.f32.xlu0 %v240
    %v242 = vpop.xlane.xlu0 %241
    %v243 = vcvt.f32.s32 %v242
    %v244 = vcvt.f32.s32 %v238
    %v245 = vshll.u32 %v244, 16
    %v246 = vadd.s32 %v245, %v243
    %v247 = vadd.f32 %v219, %v226
    %vm248 = vcmp.eq.s32.totalorder %v24, %v246
    %vm249 = vcmp.eq.s32.totalorder %v25, %v246
    %v250 = vsel %vm248, -inf, %v222
    %v251 = vsel %vm249, -inf, %v223
    %vm252 = vcmp.eq.f32.partialorder %v250, -inf
    %vm253 = vcmp.eq.f32.partialorder %v251, -inf
    %v254 = vmul.f32 %v247, 0.125
    %v255 = vsel %vm252, %v254, 0.0
    %v256 = vsel %vm253, %v254, 0.0
    %257 = vst [vmem:[#allocation5] sm:$0xff] %v255
    %258 = vst [vmem:[#allocation5 + $0x8] sm:$0xff] %v256
    // Predicated region
    $region10: #{tpu_custom_call.1} parent=1 // pred_check
      _
    $region11: #{tpu_custom_call.1} parent=1 // pred_check_branch
      %260 = sbr.rel (0) target = $region13
    $region12: #{tpu_custom_call.1} parent=1 // pred_region
      %262 = vsyncadd [#allocation4], 0
      %s264 = sshll.u32 [#allocation5], 4
      %s265 = int_to_ptr.vmem [resolvable:$true] %s264
      %s266 = sshll.u32 %s1, 4
      %s267 = int_to_ptr.hbm [resolvable:$true] %s266
      %269 = dma.vmem_to_hbm [thread:$0]  %s265, 256, %s267, [#allocation4]
    $region13: #{tpu_custom_call.1} parent=1 // pred_fallthru
      _
    // Predicated region
    $region14: #{tpu_custom_call.1} parent=1 // pred_check
      _
    $region15: #{tpu_custom_call.1} parent=1 // pred_check_branch
      %271 = sbr.rel (0) target = $region17
    $region16: #{tpu_custom_call.1} parent=1 // pred_region
      %273 = dma.done [#allocation4], 256
    $region17: #{tpu_custom_call.1} parent=1 // pred_fallthru
      _
    %274 = vsyncpa [#allocation3], 1
    %275 = vsyncpa [#allocation4], 1

</llo_original>
